<compile_context>
chip_gen: v7x
topology: tpu7x:2x2x1
jax: 0.10.0
libtpu: 0.0.40
codegen_flags: <defaults>
</compile_context>

<pallas_src>
import functools
import math

import jax
import jax.numpy as jnp
from jax.experimental import pallas as pl
from jax.experimental.pallas import tpu as pltpu


# Per-TensorCore VMEM budget used for tile selection.  Chosen to be safe on
# every generation (v5e default scoped limit 16 MiB, v7x physical 64 MiB/TC);
# we raise the scoped limit explicitly via vmem_limit_bytes below.
_DEFAULT_VMEM_BUDGET = 32 * 1024 * 1024


def _fa_forward_kernel(x_ref, w1_ref, w2_ref, o_ref, acc_ref, *,
                       inv_sqrt_h, matmul_dtype):
    """One (batch-tile, hidden-tile) grid step.

    x_ref:   (tb, d_in)  VMEM  activation tile
    w1_ref:  (th, d_in)  VMEM  layer-1 weight tile, PyTorch (out, in) layout
    w2_ref:  (1, th)     VMEM  layer-2 weight tile
    o_ref:   (tb, 1)     VMEM  output tile (written on the last hidden step)
    acc_ref: (tb, 1)     VMEM  f32 accumulator scratch
    """
    h = pl.program_id(1)

    @pl.when(h == 0)
    def _init():
        acc_ref[...] = jnp.zeros_like(acc_ref)

    x = x_ref[...]
    w1 = w1_ref[...]
    if matmul_dtype is not None:
        # bf16 MXU path on v6e/v7x; accumulation stays f32 via
        # preferred_element_type below.
        x = x.astype(matmul_dtype)
        w1 = w1.astype(matmul_dtype)

    # Layer 1: contract the last dim of x with the last dim of w1 (trans-B
    # contraction) so the PyTorch (out, in) weight feeds the MXU with no
    # in-kernel transpose.
    # TODO(synk): on v5e, verify with pl.lower_as_mlir that this emits no
    #             vxpose/relayout; if it does, pass W1 pre-transposed (d_in, H).
    hidden = jax.lax.dot_general(
        x, w1,
        dimension_numbers=(((1,), (1,)), ((), ())),
        preferred_element_type=jnp.float32,
    )  # (tb, th), f32
    hidden = jnp.maximum(hidden, 0.0)

    # Layer 2 (single output feature): VPU multiply + lane-axis reduction is far
    # cheaper than a second MXU pass that would use 1 of 256 result columns.
    acc_ref[...] += jnp.sum(hidden * w2_ref[...].astype(jnp.float32),
                            axis=-1, keepdims=True)

    @pl.when(h == pl.num_programs(1) - 1)
    def _finalize():
        # NOTE: (tb, 1) output is lane-sparse, but output traffic is only
        # ~4 bytes/row; not worth an XLU transpose to densify (per review).
        o_ref[...] = (acc_ref[...] * inv_sqrt_h).astype(o_ref.dtype)


def _select_hidden_tile(hidden_features, d_in, itemsize, budget):
    # Keep W1 fully resident when its (double-buffered) footprint is small;
    # otherwise stream it in lane-aligned tiles that divide H evenly.
    if 2 * hidden_features * d_in * itemsize <= budget // 2:
        return hidden_features
    for th in (4096, 2048, 1024, 512, 256, 128):
        if hidden_features % th == 0 and 2 * th * d_in * itemsize <= budget // 2:
            return th
    return hidden_features  # fallback: resident (vmem_limit is raised to match)


def _select_batch_tile(batch, d_in, th, itemsize, budget):
    # VMEM bytes per batch row: double-buffered x, f32 hidden intermediate
    # (+ one temporary), double-buffered output, accumulator.
    per_row = 2 * d_in * itemsize + 2 * th * 4 + 2 * itemsize + 4
    weight_bytes = 2 * th * (d_in + 1) * itemsize
    avail = max(budget - weight_bytes, 8 * per_row)
    tb = min(1024, max(8, (avail // per_row) // 8 * 8))
    # A single full-extent block needs no 8-alignment and wastes no rows.
    return batch if tb >= batch else int(tb)


def two_layer_fa_relu_forward(x, w1, w2, *, block_batch=None, block_hidden=None,
                              matmul_dtype=None,
                              vmem_budget_bytes=_DEFAULT_VMEM_BUDGET):
    """x: (B, d_in), w1: (H, d_in), w2: (1, H) -> (B, 1)."""
    batch, d_in = x.shape
    hidden_features, d_in_w = w1.shape
    assert d_in == d_in_w
    assert w2.shape == (1, hidden_features)
    itemsize = jnp.dtype(x.dtype).itemsize

    # --- Hidden (reduction) tile --------------------------------------------
    if block_hidden is None:
        th = _select_hidden_tile(hidden_features, d_in, itemsize,
                                 vmem_budget_bytes)
    else:
        th = int(block_hidden)
        assert th == hidden_features or (
            hidden_features % th == 0 and th % 128 == 0
        ), "block_hidden must equal H or be a lane-aligned (x128) divisor of H"
    num_h = hidden_features // th

    # --- Batch tile -----------------------------------------------------------
    if block_batch is None:
        tb = _select_batch_tile(batch, d_in, th, itemsize, vmem_budget_bytes)
    else:
        tb = min(batch, max(1, int(block_batch)))
        if tb < batch:
            tb = max(8, (tb // 8) * 8)  # partial tiles need sublane alignment
        if tb >= batch:
            tb = batch                  # full-extent block: no alignment needed
    num_b = pl.cdiv(batch, tb)

    grid = (num_b, num_h)

    kernel = functools.partial(
        _fa_forward_kernel,
        inv_sqrt_h=1.0 / math.sqrt(hidden_features),
        matmul_dtype=matmul_dtype,
    )

    # Explicit scoped-VMEM limit from the actual footprint (defaults: 16 MiB on
    # v5e, 32 MiB on v6e/v7x).  Weights are counted double-buffered; if your JAX
    # supports pipeline_mode=pl.Buffered(1) the resident-weight specs could be
    # single-buffered to halve that term.
    footprint = (2 * tb * d_in * itemsize      # x (double buffered)
                 + 2 * th * d_in * itemsize    # w1 (double buffered)
                 + 2 * th * itemsize           # w2
                 + 2 * tb * itemsize           # out
                 + tb * 4                      # accumulator scratch
                 + 2 * tb * th * 4)            # hidden intermediate + temp
    vmem_limit = int(min(64 * 1024 * 1024,
                         max(16 * 1024 * 1024, footprint * 3 // 2 + (2 << 20))))

    flops = 2 * batch * d_in * hidden_features + 3 * batch * hidden_features
    bytes_accessed = itemsize * (batch * d_in + hidden_features * d_in
                                 + hidden_features + batch)

    out = pl.pallas_call(
        kernel,
        out_shape=jax.ShapeDtypeStruct((batch, 1), x.dtype),
        grid_spec=pltpu.PrefetchScalarGridSpec(
            num_scalar_prefetch=0,
            grid=grid,
            in_specs=[
                # Activations: batch-tiled, re-used across the hidden axis.
                pl.BlockSpec((tb, d_in), lambda i, h: (i, 0)),
                # Layer-1 weight: streamed along the hidden ("arbitrary") axis;
                # when num_h == 1 the block index is constant -> resident.
                pl.BlockSpec((th, d_in), lambda i, h: (h, 0)),
                pl.BlockSpec((1, th), lambda i, h: (0, h)),
            ],
            out_specs=pl.BlockSpec((tb, 1), lambda i, h: (i, 0)),
            scratch_shapes=[pltpu.VMEM((tb, 1), jnp.float32)],
        ),
        compiler_params=pltpu.CompilerParams(
            # Batch tiles are independent ("parallel" -> megacore / v7x 2-TC
            # sharding); the hidden axis carries the accumulator ("arbitrary").
            dimension_semantics=("parallel", "arbitrary"),
            vmem_limit_bytes=vmem_limit,
        ),
        cost_estimate=pl.CostEstimate(
            flops=flops, transcendentals=0, bytes_accessed=bytes_accessed
        ),
    )(x, w1, w2)
    return out


def reference_forward(x, w1, w2):
    hidden = jnp.maximum(x @ w1.T, 0.0)
    return (hidden @ w2.T) / math.sqrt(w1.shape[0])


if __name__ == "__main__":
    # Small shapes consistent with the module's forward.
    batch = 20
    input_features = 32
    hidden_features = 256

    key = jax.random.PRNGKey(0)
    kx, k1, k2 = jax.random.split(key, 3)

    x = jax.random.normal(kx, (batch, input_features), dtype=jnp.float32)
    # Deterministic parameter init (Gaussian, typical for FA experiments).
    w1 = jax.random.normal(
        k1, (hidden_features, input_features), dtype=jnp.float32
    ) / jnp.sqrt(jnp.float32(input_features))
    w2 = jax.random.normal(k2, (1, hidden_features), dtype=jnp.float32)

    ref = reference_forward(x, w1, w2)

    # 1) Default path: single full-extent batch block, resident W1, grid (1, 1).
    out = jax.block_until_ready(two_layer_fa_relu_forward(x, w1, w2))
    assert out.shape == (batch, 1)
    assert jnp.allclose(out, ref, atol=1e-5, rtol=1e-5)

    # 2) Tiled path: grid (3, 2) -> partial last batch tile (masked writeback)
    #    plus hidden-axis accumulation through the scratch accumulator.
    out_tiled = jax.block_until_ready(
        two_layer_fa_relu_forward(x, w1, w2, block_batch=8, block_hidden=128)
    )
    assert out_tiled.shape == (batch, 1)
    assert jnp.allclose(out_tiled, ref, atol=1e-5, rtol=1e-5)

    # 3) bf16 MXU path (f32 accumulate) used on v6e/v7x for speed.
    out_bf16 = jax.block_until_ready(
        two_layer_fa_relu_forward(x, w1, w2, matmul_dtype=jnp.bfloat16)
    )
    assert out_bf16.shape == (batch, 1)
    assert jnp.allclose(out_bf16, ref, atol=5e-2, rtol=5e-2)

    print("KERNEL_OK")
</pallas_src>

<mosaic_0001>
module attributes {stable_mosaic.version = 11 : i64} {
  func.func @_fa_forward_kernel(%arg0: i32, %arg1: i32, %arg2: memref<20x32xf32, #tpu.memory_space<vmem>>, %arg3: memref<256x32xf32, #tpu.memory_space<vmem>>, %arg4: memref<1x256xf32, #tpu.memory_space<vmem>>, %arg5: memref<20x1xf32, #tpu.memory_space<vmem>>, %arg6: memref<20x1xf32, #tpu.memory_space<vmem>>) attributes {dimension_semantics = [#tpu.dimension_semantics<parallel>, #tpu.dimension_semantics<arbitrary>], iteration_bounds = array<i64: 1, 1>, scalar_prefetch = 0 : i64, scratch_operands = 1 : i64, tpu.core_type = #tpu.core_type<tc>, window_params = [{transform_indices = @transform_0, window_bounds = array<i64: 20, 32>}, {transform_indices = @transform_1, window_bounds = array<i64: 256, 32>}, {transform_indices = @transform_2, window_bounds = array<i64: 1, 256>}, {transform_indices = @transform_3, window_bounds = array<i64: 20, 1>}]} {
    %c0_i32 = arith.constant 0 : i32
    %0 = arith.cmpi eq, %arg1, %c0_i32 : i32
    %1 = arith.extui %0 : i1 to i32
    %c0_i32_0 = arith.constant 0 : i32
    %2 = arith.cmpi ne, %1, %c0_i32_0 : i32
    scf.if %2 {
      %cst_14 = arith.constant 0.000000e+00 : f32
      %19 = vector.broadcast %cst_14 : f32 to vector<20x1xf32>
      %c0_15 = arith.constant 0 : index
      %c0_16 = arith.constant 0 : index
      %20 = vector.load %arg6[%c0_15, %c0_16] : memref<20x1xf32, #tpu.memory_space<vmem>>, vector<20x1xf32>
      tpu.vector_store %arg6[%c0_15, %c0_16], %19 {strides = array<i32>} : memref<20x1xf32, #tpu.memory_space<vmem>>, vector<20x1xf32>,
    } else {
    }
    %c0 = arith.constant 0 : index
    %c0_1 = arith.constant 0 : index
    %3 = vector.load %arg2[%c0, %c0_1] : memref<20x32xf32, #tpu.memory_space<vmem>>, vector<20x32xf32>
    %c0_2 = arith.constant 0 : index
    %c0_3 = arith.constant 0 : index
    %4 = vector.load %arg3[%c0_2, %c0_3] : memref<256x32xf32, #tpu.memory_space<vmem>>, vector<256x32xf32>
    %cst = arith.constant dense<0.000000e+00> : vector<20x256xf32>
    %5 = tpu.matmul %3, %4, %cst {dimension_numbers = #tpu.dot_dimension_numbers<[1], [1], [0], [0], [0, 0, 1, 0], [], []>} : vector<20x32xf32>, vector<256x32xf32>, vector<20x256xf32> -> vector<20x256xf32>
    %cst_4 = arith.constant 0.000000e+00 : f32
    %6 = vector.broadcast %cst_4 : f32 to vector<20x256xf32>
    %7 = arith.maximumf %5, %6 : vector<20x256xf32>
    %c0_5 = arith.constant 0 : index
    %c0_6 = arith.constant 0 : index
    %8 = vector.load %arg6[%c0_5, %c0_6] : memref<20x1xf32, #tpu.memory_space<vmem>>, vector<20x1xf32>
    %c0_7 = arith.constant 0 : index
    %c0_8 = arith.constant 0 : index
    %9 = vector.load %arg4[%c0_7, %c0_8] : memref<1x256xf32, #tpu.memory_space<vmem>>, vector<1x256xf32>
    %10 = vector.broadcast %9 : vector<1x256xf32> to vector<20x256xf32>
    %11 = arith.mulf %7, %10 : vector<20x256xf32>
    %cst_9 = arith.constant dense<0.000000e+00> : vector<20xf32>
    %12 = vector.multi_reduction <add>, %11, %cst_9 [1] : vector<20x256xf32> to vector<20xf32>
    %13 = vector.shape_cast %12 : vector<20xf32> to vector<20x1xf32>
    %14 = arith.addf %8, %13 : vector<20x1xf32>
    %c0_10 = arith.constant 0 : index
    %c0_11 = arith.constant 0 : index
    %15 = vector.load %arg6[%c0_10, %c0_11] : memref<20x1xf32, #tpu.memory_space<vmem>>, vector<20x1xf32>
    tpu.vector_store %arg6[%c0_10, %c0_11], %14 {strides = array<i32>} : memref<20x1xf32, #tpu.memory_space<vmem>>, vector<20x1xf32>,
    %c0_i32_12 = arith.constant 0 : i32
    %16 = arith.cmpi eq, %arg1, %c0_i32_12 : i32
    %17 = arith.extui %16 : i1 to i32
    %c0_i32_13 = arith.constant 0 : i32
    %18 = arith.cmpi ne, %17, %c0_i32_13 : i32
    scf.if %18 {
      %c0_14 = arith.constant 0 : index
      %c0_15 = arith.constant 0 : index
      %19 = vector.load %arg6[%c0_14, %c0_15] : memref<20x1xf32, #tpu.memory_space<vmem>>, vector<20x1xf32>
      %cst_16 = arith.constant 6.250000e-02 : f32
      %20 = vector.broadcast %cst_16 : f32 to vector<20x1xf32>
      %21 = arith.mulf %19, %20 : vector<20x1xf32>
      %c0_17 = arith.constant 0 : index
      %c0_18 = arith.constant 0 : index
      %22 = vector.load %arg5[%c0_17, %c0_18] : memref<20x1xf32, #tpu.memory_space<vmem>>, vector<20x1xf32>
      tpu.vector_store %arg5[%c0_17, %c0_18], %21 {strides = array<i32>} : memref<20x1xf32, #tpu.memory_space<vmem>>, vector<20x1xf32>,
    } else {
    }
    return
  }
  func.func @transform_0(%arg0: i32, %arg1: i32) -> (i32, i32) {
    %c0_i32 = arith.constant 0 : i32
    %c0_i32_0 = arith.constant 0 : i32
    return %arg0, %c0_i32 : i32, i32
  }
  func.func @transform_1(%arg0: i32, %arg1: i32) -> (i32, i32) {
    %c0_i32 = arith.constant 0 : i32
    %c0_i32_0 = arith.constant 0 : i32
    return %arg1, %c0_i32 : i32, i32
  }
  func.func @transform_2(%arg0: i32, %arg1: i32) -> (i32, i32) {
    %c0_i32 = arith.constant 0 : i32
    %c0_i32_0 = arith.constant 0 : i32
    return %c0_i32, %arg1 : i32, i32
  }
  func.func @transform_3(%arg0: i32, %arg1: i32) -> (i32, i32) {
    %c0_i32 = arith.constant 0 : i32
    %c0_i32_0 = arith.constant 0 : i32
    return %arg0, %c0_i32 : i32, i32
  }
}

</mosaic_0001>

<llo_original>
// kernel: tpu_custom_call.1
$region0: #{tpu_custom_call.1}
  #allocation0 [shape = 'u32[]', space=smem, size = 0x4, offset = 0x4, fixed_abs, tag = 'smem constant byte address 0x4 - core index']
  #allocation1 [shape = 'u32[144,128]{1,0:T(1,128)}', space=vmem, size = 0x12000, scoped, tag = 'internal scratch']
  #allocation2 [shape = 'f32[20,1]{1,0:T(8,128)}', space=vmem, size = 0x3000, scoped, tag = 'scratch operand']
  %s0 = inlined_call_operand.vmem [shape: f32[20,32], index: 0, kind: input, shape index: {}]
  %s1 = inlined_call_operand.vmem [shape: f32[256,32], index: 1, kind: input, shape index: {}]
  %s2 = inlined_call_operand.vmem [shape: f32[1,256], index: 2, kind: input, shape index: {}]
  %s3 = inlined_call_operand.vmem [shape: f32[20,1], index: 3, kind: output, shape index: {}]
  %s4 = sld [smem:[#allocation0]]
  $region30: #{tpu_custom_call.1} parent=0
    _
  %s6 = ssub.s32 1, %s4
  %s7 = scalar_select 0, %s6, %s4
  // Predicated region
  $region2: #{tpu_custom_call.1} parent=0 // pred_check
    _
  $region3: #{tpu_custom_call.1} parent=0 // pred_check_branch
    %9 = sbr.rel (0) target = $region5
  $region4: #{tpu_custom_call.1} parent=0 // pred_region
    _
  $region5: #{tpu_custom_call.1} parent=0 // pred_fallthru
    _
  // Predicated region
  $region6: #{tpu_custom_call.1} parent=0 // pred_check
    _
  $region7: #{tpu_custom_call.1} parent=0 // pred_check_branch
    %11 = sbr.rel (0) target = $region9
  $region8: #{tpu_custom_call.1} parent=0 // pred_region
    _
  $region9: #{tpu_custom_call.1} parent=0 // pred_fallthru
    _
  // Predicated region
  $region10: #{tpu_custom_call.1} parent=0 // pred_check
    _
  $region11: #{tpu_custom_call.1} parent=0 // pred_check_branch
    %13 = sbr.rel (0) target = $region13
  $region12: #{tpu_custom_call.1} parent=0 // pred_region
    _
  $region13: #{tpu_custom_call.1} parent=0 // pred_fallthru
    _
  %p14 = scmp.eq.s32.totalorder 0, 0
  // Predicated region
  $region14: #{tpu_custom_call.1} parent=0 // pred_check
    %p15 = pneg %p14
  $region15: #{tpu_custom_call.1} parent=0 // pred_check_branch
    %17 = sbr.rel (%p15) target = $region17
  $region16: #{tpu_custom_call.1} parent=0 // pred_region
    %vm18 = vcmask 7168
    %19 = vst.msk [vmem:[#allocation2] sm:$0xff] %vm18, 0.0
    %20 = vst.msk [vmem:[#allocation2 + $0x8] sm:$0xff] %vm18, 0.0
    %vm21 = vcmask 3072
    %22 = vst.msk [vmem:[#allocation2 + $0x10] sm:$0xf] %vm21, 0.0
  $region17: #{tpu_custom_call.1} parent=0 // pred_fallthru
    _
  %v23 = vld [vmem:[%s0] sm:$0xff]
  %v24 = vld [vmem:[%s0 + $0x8] sm:$0xff]
  %v25 = vld [vmem:[%s0 + $0x10] sm:$0xf]
  %v26 = vld [vmem:[%s1] sm:$0xff]
  %v27 = vld [vmem:[%s1 + $0x8] sm:$0xff]
  %v28 = vld [vmem:[%s1 + $0x10] sm:$0xff]
  %v29 = vld [vmem:[%s1 + $0x18] sm:$0xff]
  %v30 = vld [vmem:[%s1 + $0x20] sm:$0xff]
  %v31 = vld [vmem:[%s1 + $0x28] sm:$0xff]
  %v32 = vld [vmem:[%s1 + $0x30] sm:$0xff]
  %v33 = vld [vmem:[%s1 + $0x38] sm:$0xff]
  %v34 = vld [vmem:[%s1 + $0x40] sm:$0xff]
  %v35 = vld [vmem:[%s1 + $0x48] sm:$0xff]
  %v36 = vld [vmem:[%s1 + $0x50] sm:$0xff]
  %v37 = vld [vmem:[%s1 + $0x58] sm:$0xff]
  %v38 = vld [vmem:[%s1 + $0x60] sm:$0xff]
  %v39 = vld [vmem:[%s1 + $0x68] sm:$0xff]
  %v40 = vld [vmem:[%s1 + $0x70] sm:$0xff]
  %v41 = vld [vmem:[%s1 + $0x78] sm:$0xff]
  %v42 = vld [vmem:[%s1 + $0x80] sm:$0xff]
  %v43 = vld [vmem:[%s1 + $0x88] sm:$0xff]
  %v44 = vld [vmem:[%s1 + $0x90] sm:$0xff]
  %v45 = vld [vmem:[%s1 + $0x98] sm:$0xff]
  %v46 = vld [vmem:[%s1 + $0xa0] sm:$0xff]
  %v47 = vld [vmem:[%s1 + $0xa8] sm:$0xff]
  %v48 = vld [vmem:[%s1 + $0xb0] sm:$0xff]
  %v49 = vld [vmem:[%s1 + $0xb8] sm:$0xff]
  %v50 = vld [vmem:[%s1 + $0xc0] sm:$0xff]
  %v51 = vld [vmem:[%s1 + $0xc8] sm:$0xff]
  %v52 = vld [vmem:[%s1 + $0xd0] sm:$0xff]
  %v53 = vld [vmem:[%s1 + $0xd8] sm:$0xff]
  %v54 = vld [vmem:[%s1 + $0xe0] sm:$0xff]
  %v55 = vld [vmem:[%s1 + $0xe8] sm:$0xff]
  %v56 = vld [vmem:[%s1 + $0xf0] sm:$0xff]
  %v57 = vld [vmem:[%s1 + $0xf8] sm:$0xff]
  %vm58 = vcmask 261120
  %v60 = vsel %vm58, %v23, 0
  %v63 = vsel %vm58, %v24, 0
  %v66 = vsel %vm58, %v25, 0
  %v69 = vsel %vm58, %v26, 0
  %v72 = vsel %vm58, %v27, 0
  %v75 = vsel %vm58, %v28, 0
  %v78 = vsel %vm58, %v29, 0
  %v81 = vsel %vm58, %v30, 0
  %v84 = vsel %vm58, %v31, 0
  %v87 = vsel %vm58, %v32, 0
  %v90 = vsel %vm58, %v33, 0
  %v93 = vsel %vm58, %v34, 0
  %v96 = vsel %vm58, %v35, 0
  %v99 = vsel %vm58, %v36, 0
  %v102 = vsel %vm58, %v37, 0
  %v105 = vsel %vm58, %v38, 0
  %v108 = vsel %vm58, %v39, 0
  %v111 = vsel %vm58, %v40, 0
  %v114 = vsel %vm58, %v41, 0
  %v117 = vsel %vm58, %v42, 0
  %v120 = vsel %vm58, %v43, 0
  %v123 = vsel %vm58, %v44, 0
  %v126 = vsel %vm58, %v45, 0
  %v129 = vsel %vm58, %v46, 0
  %v132 = vsel %vm58, %v47, 0
  %v135 = vsel %vm58, %v48, 0
  %v138 = vsel %vm58, %v49, 0
  %v141 = vsel %vm58, %v50, 0
  %v144 = vsel %vm58, %v51, 0
  %v147 = vsel %vm58, %v52, 0
  %v150 = vsel %vm58, %v53, 0
  %v153 = vsel %vm58, %v54, 0
  %v156 = vsel %vm58, %v55, 0
  %v159 = vsel %vm58, %v56, 0
  %v162 = vsel %vm58, %v57, 0
  %164 = vmatprep.subr.mxu0 0.0
  %165 = vmatpush1.xpose.msra.mxu0 %v69
  %166 = vmatprep.subr.mxu0 0.0
  %167 = vmatpush1.xpose.msra.mxu0 %v72
  %168 = vmatprep.subr.mxu0 0.0
  %169 = vmatpush1.xpose.msra.mxu0 %v75
  %170 = vmatprep.subr.mxu0 0.0
  %171 = vmatpush1.xpose.msra.mxu0 %v78
  %172 = vmatprep.subr.mxu0 0.0
  %173 = vmatpush1.xpose.msra.mxu0 %v81
  %174 = vmatprep.subr.mxu0 0.0
  %175 = vmatpush1.xpose.msra.mxu0 %v84
  %176 = vmatprep.subr.mxu0 0.0
  %177 = vmatpush1.xpose.msra.mxu0 %v87
  %178 = vmatprep.subr.mxu0 0.0
  %179 = vmatpush1.xpose.msra.mxu0 %v90
  %180 = vmatprep.subr.mxu0 0.0
  %181 = vmatpush1.xpose.msra.mxu0 %v93
  %182 = vmatprep.subr.mxu0 0.0
  %183 = vmatpush1.xpose.msra.mxu0 %v96
  %184 = vmatprep.subr.mxu0 0.0
  %185 = vmatpush1.xpose.msra.mxu0 %v99
  %186 = vmatprep.subr.mxu0 0.0
  %187 = vmatpush1.xpose.msra.mxu0 %v102
  %188 = vmatprep.subr.mxu0 0.0
  %189 = vmatpush1.xpose.msra.mxu0 %v105
  %190 = vmatprep.subr.mxu0 0.0
  %191 = vmatpush1.xpose.msra.mxu0 %v108
  %192 = vmatprep.subr.mxu0 0.0
  %193 = vmatpush1.xpose.msra.mxu0 %v111
  %194 = vmatprep.subr.mxu0 0.0
  %195 = vmatpush1.xpose.msra.mxu0 %v114
  %196 = vmatprep.subr.mxu0 0.0
  %197 = vmatpush1.xpose.msra.mxu0 %v117
  %198 = vmatprep.subr.mxu0 0.0
  %199 = vmatpush1.xpose.msra.mxu0 %v120
  %200 = vmatprep.subr.mxu0 0.0
  %201 = vmatpush1.xpose.msra.mxu0 %v123
  %202 = vmatprep.subr.mxu0 0.0
  %203 = vmatpush1.xpose.msra.mxu0 %v126
  %204 = vmatprep.subr.mxu0 0.0
  %205 = vmatpush1.xpose.msra.mxu0 %v129
  %206 = vmatprep.subr.mxu0 0.0
  %207 = vmatpush1.xpose.msra.mxu0 %v132
  %208 = vmatprep.subr.mxu0 0.0
  %209 = vmatpush1.xpose.msra.mxu0 %v135
  %210 = vmatprep.subr.mxu0 0.0
  %211 = vmatpush1.xpose.msra.mxu0 %v138
  %212 = vmatprep.subr.mxu0 0.0
  %213 = vmatpush1.xpose.msra.mxu0 %v141
  %214 = vmatprep.subr.mxu0 0.0
  %215 = vmatpush1.xpose.msra.mxu0 %v144
  %216 = vmatprep.subr.mxu0 0.0
  %217 = vmatpush1.xpose.msra.mxu0 %v147
  %218 = vmatprep.subr.mxu0 0.0
  %219 = vmatpush1.xpose.msra.mxu0 %v150
  %220 = vmatprep.subr.mxu0 0.0
  %221 = vmatpush1.xpose.msra.mxu0 %v153
  %222 = vmatprep.subr.mxu0 0.0
  %223 = vmatpush1.xpose.msra.mxu0 %v156
  %224 = vmatprep.subr.mxu0 0.0
  %225 = vmatpush1.xpose.msra.mxu0 %v159
  %226 = vmatprep.subr.mxu0 0.0
  %227 = vmatpush1.xpose.msra.mxu0 %v162
  %228 = vmatprep.mubr.f32.mxu0 0.0
  %229 = vmatmul.mubr.f32.gmra.mrb[0].mxu0 %v60
  %v230 = vpop.f32.mrb[0].mxu0
  %v231 = vadd.f32 0.0, %v230
  %v232 = vpop.f32.mrb[0].mxu0
  %v233 = vadd.f32 0.0, %v232
  %234 = vmatprep.mubr.f32.mxu0 0.0
  %235 = vmatmul.mubr.f32.gmra.mrb[0].mxu0 %v63
  %v236 = vpop.f32.mrb[0].mxu0
  %v237 = vadd.f32 0.0, %v236
  %v238 = vpop.f32.mrb[0].mxu0
  %v239 = vadd.f32 0.0, %v238
  %240 = vmatprep.mubr.f32.mxu0 0.0
  %241 = vmatmul.mubr.f32.gmra.mrb[0].mxu0 %v66
  %v242 = vpop.f32.mrb[0].mxu0
  %v243 = vadd.f32 0.0, %v242
  %v244 = vpop.f32.mrb[0].mxu0
  %v245 = vadd.f32 0.0, %v244
  %246 = vdwg.mxu0
  %v247 = vmax.f32 %v231, 0.0
  %v248 = vmax.f32 %v233, 0.0
  %v249 = vmax.f32 %v237, 0.0
  %v250 = vmax.f32 %v239, 0.0
  %v251 = vmax.f32 %v243, 0.0
  %v252 = vmax.f32 %v245, 0.0
  %v253 = vld [vmem:[#allocation2] sm:$0xff]
  %v254 = vld [vmem:[#allocation2 + $0x8] sm:$0xff]
  %v255 = vld [vmem:[#allocation2 + $0x10] sm:$0xf]
  %v256 = vld [vmem:[%s2] sm:$0x3]
  %v258 = vlaneseq
  %v259 = vshrl.u32 %v258, 7
  %v260 = vsub.s32 0, %v259
  %v261 = vrot.slane %v256, %v260
  %v262 = vlaneseq
  %v263 = vshrl.u32 %v262, 7
  %v264 = vsub.s32 1, %v263
  %v265 = vrot.slane %v256, %v264
  %v268 = vmul.f32 %v247, %v261
  %v269 = vmul.f32 %v248, %v265
  %v270 = vmul.f32 %v249, %v261
  %v271 = vmul.f32 %v250, %v265
  %v272 = vmul.f32 %v251, %v261
  %v273 = vmul.f32 %v252, %v265
  %v274 = vadd.f32 %v268, %v269
  %275 = vadd.xlane.f32.xlu0 %v274
  %v276 = vpop.xlane.xlu0 %275
  %v277 = vadd.f32 %v270, %v271
  %278 = vadd.xlane.f32.xlu0 %v277
  %v279 = vpop.xlane.xlu0 %278
  %vm280 = vcmask 1043456
  %v281 = vsel %vm280, %v272, 0.0
  %v282 = vsel %vm280, %v273, 0.0
  %v283 = vadd.f32 %v281, %v282
  %284 = vadd.xlane.f32.xlu0 %v283
  %v285 = vpop.xlane.xlu0 %284
  %v286 = vadd.f32 %v253, %v276
  %v287 = vadd.f32 %v254, %v279
  %v288 = vadd.f32 %v255, %v285
  %vm289 = vcmask 7168
  %290 = vst.msk [vmem:[#allocation2] sm:$0xff] %vm289, %v286
  %291 = vst.msk [vmem:[#allocation2 + $0x8] sm:$0xff] %vm289, %v287
  %vm292 = vcmask 3072
  %293 = vst.msk [vmem:[#allocation2 + $0x10] sm:$0xf] %vm292, %v288
  // Predicated region
  $region18: #{tpu_custom_call.1} parent=0 // pred_check
    %p294 = pneg %p14
  $region19: #{tpu_custom_call.1} parent=0 // pred_check_branch
    %296 = sbr.rel (%p294) target = $region21
  $region20: #{tpu_custom_call.1} parent=0 // pred_region
    %v297 = vld [vmem:[#allocation2] sm:$0xff]
    %v298 = vld [vmem:[#allocation2 + $0x8] sm:$0xff]
    %v299 = vld [vmem:[#allocation2 + $0x10] sm:$0xf]
    %v300 = vmul.f32 %v297, 0.0625
    %v301 = vmul.f32 %v298, 0.0625
    %v302 = vmul.f32 %v299, 0.0625
    %303 = vst.msk [vmem:[%s3] sm:$0xff] %vm289, %v300
    %304 = vst.msk [vmem:[%s3 + $0x8] sm:$0xff] %vm289, %v301
    %305 = vst.msk [vmem:[%s3 + $0x10] sm:$0xf] %vm292, %v302
  $region21: #{tpu_custom_call.1} parent=0 // pred_fallthru
    _
  // Predicated region
  $region22: #{tpu_custom_call.1} parent=0 // pred_check
    _
  $region23: #{tpu_custom_call.1} parent=0 // pred_check_branch
    %307 = sbr.rel (0) target = $region25
  $region24: #{tpu_custom_call.1} parent=0 // pred_region
    _
  $region25: #{tpu_custom_call.1} parent=0 // pred_fallthru
    _
  // Predicated region
  $region26: #{tpu_custom_call.1} parent=0 // pred_check
    _
  $region27: #{tpu_custom_call.1} parent=0 // pred_check_branch
    %309 = sbr.rel (0) target = $region29
  $region28: #{tpu_custom_call.1} parent=0 // pred_region
    _
  $region29: #{tpu_custom_call.1} parent=0 // pred_fallthru
    _

</llo_original>
